<compile_context>
chip_gen: v7x
topology: tpu7x:2x2x1
jax: 0.10.0
libtpu: 0.0.40
codegen_flags: <defaults>
</compile_context>

<pallas_src>
import jax
import jax.numpy as jnp
from jax.experimental import pallas as pl
from jax.experimental.pallas import tpu as pltpu

_LANES = 128       # vreg lane width
_TILE_ROWS = 512   # 512 x 128 f32 = 256 KiB per block (VMEM-safe on all chips)


def _copy_kernel(x_ref, o_ref):
    # Whole-tile copy (the module's forward is `return x`).
    o_ref[...] = x_ref[...]


def linearnet_forward(x):
    """LinearNet.forward — a literal identity.  Zero-cost fast path."""
    return x


@jax.jit
def linearnet_forward_pallas(x):
    """Identity through an explicit Pallas boundary (minimal overhead)."""
    orig_shape = x.shape
    total = x.size

    # Present a lane-dense (multiple-of-128) last dim whenever possible.
    if total % _LANES == 0:
        rows, cols = total // _LANES, _LANES
    else:
        rows, cols = 1, total  # fallback: single row, full-array block
    x2 = x.reshape(rows, cols)

    if cols == _LANES and rows % _TILE_ROWS == 0 and rows > _TILE_ROWS:
        # Large input: tile rows so the pipeline double-buffers the copy and
        # the row axis shards across both TensorCores on v7x.
        y2 = pl.pallas_call(
            _copy_kernel,
            out_shape=jax.ShapeDtypeStruct((rows, cols), x2.dtype),
            grid=(rows // _TILE_ROWS,),
            in_specs=[pl.BlockSpec((_TILE_ROWS, cols), lambda i: (i, 0))],
            out_specs=pl.BlockSpec((_TILE_ROWS, cols), lambda i: (i, 0)),
            input_output_aliases={0: 0},
            compiler_params=pltpu.CompilerParams(
                dimension_semantics=("parallel",)
            ),
        )(x2)
    else:
        # Small input: single full-array block, no grid (no pipeline
        # prologue/epilogue), output aliased onto the input buffer.
        y2 = pl.pallas_call(
            _copy_kernel,
            out_shape=jax.ShapeDtypeStruct((rows, cols), x2.dtype),
            input_output_aliases={0: 0},
        )(x2)

    return y2.reshape(orig_shape)


def init_linearnet_params(key, input_size, num_layers, layers_size, output_size):
    """Build the (unused) nn.Linear parameters of LinearNet, mirroring __init__."""
    dims = [(input_size, layers_size[0])]
    dims += [(layers_size[i - 1], layers_size[i]) for i in range(1, num_layers - 1)]
    dims += [(layers_size[num_layers - 2], output_size)]

    params = []
    for fan_in, fan_out in dims:
        key, wk, bk = jax.random.split(key, 3)
        bound = 1.0 / jnp.sqrt(fan_in)
        w = jax.random.uniform(wk, (fan_out, fan_in), jnp.float32, -bound, bound)
        b = jax.random.uniform(bk, (fan_out,), jnp.float32, -bound, bound)
        params.append({"weight": w, "bias": b})
    return params


if __name__ == "__main__":
    key = jax.random.PRNGKey(0)

    # Small shapes consistent with a LinearNet: batch=8, input_size=32.
    batch, input_size = 8, 32
    num_layers = 3
    layers_size = [16, 16]
    output_size = 4

    # Parameters exist (as in __init__) but forward() ignores them.
    _params = init_linearnet_params(
        key, input_size, num_layers, layers_size, output_size
    )

    key, xk = jax.random.split(key)
    x = jax.random.normal(xk, (batch, input_size), dtype=jnp.float32)

    # Fast path (what the module actually does: return x).
    y_fast = linearnet_forward(x)

    # Pallas identity boundary (lane-dense, aliased copy kernel).
    y_pallas = linearnet_forward_pallas(x)
    jax.block_until_ready(y_pallas)

    assert y_fast.shape == x.shape and y_fast.dtype == x.dtype
    assert y_pallas.shape == x.shape and y_pallas.dtype == x.dtype
    assert bool(jnp.all(y_fast == x))
    assert bool(jnp.all(y_pallas == x))
    print("KERNEL_OK")
</pallas_src>

<mosaic_0001>
module attributes {stable_mosaic.version = 11 : i64} {
  func.func @_copy_kernel(%arg0: memref<2x128xf32, #tpu.memory_space<vmem>>, %arg1: memref<2x128xf32, #tpu.memory_space<vmem>>) attributes {dimension_semantics = [], scalar_prefetch = 0 : i64, scratch_operands = 0 : i64, tpu.core_type = #tpu.core_type<tc>} {
    %c0 = arith.constant 0 : index
    %c0_0 = arith.constant 0 : index
    %0 = vector.load %arg0[%c0, %c0_0] : memref<2x128xf32, #tpu.memory_space<vmem>>, vector<2x128xf32>
    %c0_1 = arith.constant 0 : index
    %c0_2 = arith.constant 0 : index
    %1 = vector.load %arg1[%c0_1, %c0_2] : memref<2x128xf32, #tpu.memory_space<vmem>>, vector<2x128xf32>
    tpu.vector_store %arg1[%c0_1, %c0_2], %0 {strides = array<i32>} : memref<2x128xf32, #tpu.memory_space<vmem>>, vector<2x128xf32>,
    return
  }
}

</mosaic_0001>

<llo_original>
// kernel: linearnet_forward_pallas.1
$region0: #{linearnet_forward_pallas.1}
  #allocation0 [shape = 'u32[]', space=smem, size = 0x4, offset = 0x4, fixed_abs, tag = 'smem constant byte address 0x4 - core index']
  #allocation1 [shape = 'u32[144,128]{1,0:T(1,128)}', space=vmem, size = 0x12000, scoped, tag = 'internal scratch']
  %s0 = inlined_call_operand.vmem [shape: f32[2,128], index: 0, kind: input, shape index: {}, may-alias: {0,1}]
  %s1 = inlined_call_operand.vmem [shape: f32[2,128], index: 1, kind: output, shape index: {}, may-alias: {0,1}]
  %s2 = sld [smem:[#allocation0]]
  $region14: #{linearnet_forward_pallas.1} parent=0
    _
  %s4 = ssub.s32 1, %s2
  %s5 = scalar_select 0, %s4, %s2
  // Predicated region
  $region2: #{linearnet_forward_pallas.1} parent=0 // pred_check
    _
  $region3: #{linearnet_forward_pallas.1} parent=0 // pred_check_branch
    %7 = sbr.rel (0) target = $region5
  $region4: #{linearnet_forward_pallas.1} parent=0 // pred_region
    _
  $region5: #{linearnet_forward_pallas.1} parent=0 // pred_fallthru
    _
  %v8 = vld [vmem:[%s0] sm:$0x3]
  %9 = vst [vmem:[%s1] sm:$0x3] %v8
  // Predicated region
  $region6: #{linearnet_forward_pallas.1} parent=0 // pred_check
    _
  $region7: #{linearnet_forward_pallas.1} parent=0 // pred_check_branch
    %11 = sbr.rel (0) target = $region9
  $region8: #{linearnet_forward_pallas.1} parent=0 // pred_region
    _
  $region9: #{linearnet_forward_pallas.1} parent=0 // pred_fallthru
    _
  // Predicated region
  $region10: #{linearnet_forward_pallas.1} parent=0 // pred_check
    _
  $region11: #{linearnet_forward_pallas.1} parent=0 // pred_check_branch
    %13 = sbr.rel (0) target = $region13
  $region12: #{linearnet_forward_pallas.1} parent=0 // pred_region
    _
  $region13: #{linearnet_forward_pallas.1} parent=0 // pred_fallthru
    _

</llo_original>
